<compile_context>
chip_gen: v5e
topology: v5e:2x2
jax: 0.10.0
libtpu: 0.0.40
codegen_flags: <defaults>
</compile_context>

<pallas_src>
import functools

import jax
import jax.numpy as jnp
from jax.experimental import pallas as pl
from jax.experimental.pallas import tpu as pltpu


def _rbf_knrm_kernel(sim_ref, mask_ref, out_ref, acc_ref, *, coeffs):
    """Grid = (B tiles, Q tiles, D tiles), D innermost (reduction).

    sim_ref : [TB, TQ, TD] f32  similarity tile
    mask_ref: [TB, TQ]     i32  1 == padded query position
    out_ref : [TB, K]      f32  resident across the q/d grid axes (accumulator)
    acc_ref : [K, TB, TQ]  f32  partial D-sums for the current (b, q) tile
    """
    q_idx = pl.program_id(1)
    d_idx = pl.program_id(2)
    n_d = pl.num_programs(2)

    # New (b, q) tile -> reset the per-kernel D accumulators.
    @pl.when(d_idx == 0)
    def _():
        acc_ref[...] = jnp.zeros_like(acc_ref)

    sim = sim_ref[...]          # [TB, TQ, TD]
    sim2 = sim * sim            # hoisted: k-invariant

    # K is small and static -> unrolled. Coefficients are trace-time constants,
    # so there is no SMEM traffic and no per-element divide.
    for k, (a_k, b_k, c_k) in enumerate(coeffs):
        arg = a_k * sim2 + b_k * sim + c_k              # == -0.5*(s-m)^2/sig^2
        acc_ref[k] += jnp.sum(jnp.exp(arg), axis=-1)    # [TB, TQ]

    # D reduction finished for this (b, q) tile: mask, log, sum over Q and
    # accumulate into the resident output block.
    @pl.when(d_idx == n_d - 1)
    def _():
        mask = mask_ref[...] > 0                        # [TB, TQ], True==masked
        cols = []
        for k in range(len(coeffs)):
            feat = jnp.where(mask, 0.0, acc_ref[k])     # masked_fill_(mask, 0)
            cols.append(
                jnp.sum(jnp.log(feat + 1e-10), axis=-1, keepdims=True))  # [TB,1]
        contrib = jnp.concatenate(cols, axis=1).astype(out_ref.dtype)    # [TB,K]

        @pl.when(q_idx == 0)
        def _():
            out_ref[...] = contrib

        @pl.when(q_idx > 0)
        def _():
            out_ref[...] = out_ref[...] + contrib


def _pick_tile(dim, candidates):
    for c in candidates:
        if c <= dim and dim % c == 0:
            return c
    return dim


def rbf_kernel_list(similarity_matrix, query_mask, initial_mean_list,
                    initial_stddev_list):
    """similarity_matrix: [B, Q, D]; query_mask: [B, Q] (True/1 == padded).

    Returns [B, K] f32 where K = len(initial_mean_list).
    """
    means = [float(m) for m in initial_mean_list]
    stds = [float(s) for s in initial_stddev_list]
    assert len(means) == len(stds) and len(means) > 0
    kernel_count = len(means)

    # Fold frozen per-kernel params into polynomial coefficients (no divide
    # inside the kernel):  -0.5*(s-m)^2/sig^2 = a*s^2 + b*s + c.
    coeffs = tuple(
        (-0.5 / (s * s), m / (s * s), -0.5 * m * m / (s * s))
        for m, s in zip(means, stds)
    )

    sim = similarity_matrix.astype(jnp.float32)
    mask_i32 = query_mask.astype(jnp.int32)
    B, Q, D = sim.shape

    # Tile sizes: keep sim-tile x 2 pipeline buffers + scratch comfortably
    # inside default scoped VMEM on every generation (16/32/32 MiB).
    tb = 8 if B % 8 == 0 else B              # sublane-friendly batch tile
    tq = _pick_tile(Q, (256, 128))           # multiple of 128 (mask lanes) or Q
    td = _pick_tile(D, (512, 256, 128))      # multiple of 128 (sim lanes) or D
    grid = (B // tb, Q // tq, D // td)

    kernel = functools.partial(_rbf_knrm_kernel, coeffs=coeffs)

    return pl.pallas_call(
        kernel,
        out_shape=jax.ShapeDtypeStruct((B, kernel_count), jnp.float32),
        grid_spec=pltpu.PrefetchScalarGridSpec(
            num_scalar_prefetch=0,
            grid=grid,
            in_specs=[
                pl.BlockSpec((tb, tq, td), lambda b, q, d: (b, q, d)),  # sim
                pl.BlockSpec((tb, tq), lambda b, q, d: (b, q)),         # mask
            ],
            out_specs=pl.BlockSpec((tb, kernel_count),
                                   lambda b, q, d: (b, 0)),
            scratch_shapes=[pltpu.VMEM((kernel_count, tb, tq), jnp.float32)],
        ),
        compiler_params=pltpu.CompilerParams(
            dimension_semantics=("parallel", "arbitrary", "arbitrary"),
            vmem_limit_bytes=32 * 1024 * 1024,
        ),
    )(sim, mask_i32)


def _reference(similarity_matrix, query_mask, means, stddevs):
    sim = similarity_matrix.astype(jnp.float32)[:, None, :, :]        # [B,1,Q,D]
    mean = jnp.asarray(means, jnp.float32)[None, :, None, None]       # [1,K,1,1]
    std = jnp.asarray(stddevs, jnp.float32)[None, :, None, None]
    rbf = jnp.exp(-0.5 * (sim - mean) ** 2 / std ** 2).sum(-1)        # [B,K,Q]
    rbf = jnp.where(query_mask[:, None, :], 0.0, rbf)
    return jnp.log(rbf + 1e-10).sum(-1)                               # [B,K]


if __name__ == "__main__":
    # Deterministic parameters (as the module __init__ would receive them).
    initial_mean_list = [-0.9, -0.5, 0.0, 0.5, 0.9]
    initial_stddev_list = [0.1, 0.1, 0.1, 0.1, 0.1]

    key = jax.random.PRNGKey(0)

    # Test 1: tiny shape (single grid tile).
    # Test 2: shape exercising multi-tile Q/D accumulation (grid = (1, 2, 3)).
    for (B, Q, D) in ((2, 8, 16), (2, 512, 384)):
        key, k_sim, k_mask = jax.random.split(key, 3)
        similarity_matrix = jax.random.uniform(
            k_sim, (B, Q, D), dtype=jnp.float32, minval=-1.0, maxval=1.0)
        # True == padded query position (masked_fill'ed to 0 before the log).
        query_mask = jax.random.bernoulli(k_mask, p=0.25, shape=(B, Q))

        out = rbf_kernel_list(similarity_matrix, query_mask,
                              initial_mean_list, initial_stddev_list)
        out = jax.block_until_ready(out)

        ref = _reference(similarity_matrix, query_mask,
                         initial_mean_list, initial_stddev_list)
        assert out.shape == (B, len(initial_mean_list))
        assert jnp.allclose(out, ref, rtol=1e-4, atol=1e-2), (
            f"mismatch at shape {(B, Q, D)}: "
            f"max abs err {jnp.max(jnp.abs(out - ref))}")

    print("KERNEL_OK")
</pallas_src>

<mosaic_0001>
module attributes {stable_mosaic.version = 11 : i64} {
  func.func @_rbf_knrm_kernel(%arg0: i32, %arg1: i32, %arg2: i32, %arg3: memref<2x8x16xf32, #tpu.memory_space<vmem>>, %arg4: memref<2x8xi32, #tpu.memory_space<vmem>>, %arg5: memref<2x5xf32, #tpu.memory_space<vmem>>, %arg6: memref<5x2x8xf32, #tpu.memory_space<vmem>>) attributes {dimension_semantics = [#tpu.dimension_semantics<parallel>, #tpu.dimension_semantics<arbitrary>, #tpu.dimension_semantics<arbitrary>], iteration_bounds = array<i64: 1, 1, 1>, scalar_prefetch = 0 : i64, scratch_operands = 1 : i64, tpu.core_type = #tpu.core_type<tc>, window_params = [{transform_indices = @transform_0, window_bounds = array<i64: 2, 8, 16>}, {transform_indices = @transform_1, window_bounds = array<i64: 2, 8>}, {transform_indices = @transform_2, window_bounds = array<i64: 2, 5>}]} {
    %c0_i32 = arith.constant 0 : i32
    %0 = arith.cmpi eq, %arg2, %c0_i32 : i32
    %1 = arith.extui %0 : i1 to i32
    %c0_i32_0 = arith.constant 0 : i32
    %2 = arith.cmpi ne, %1, %c0_i32_0 : i32
    scf.if %2 {
      %cst_50 = arith.constant 0.000000e+00 : f32
      %83 = vector.broadcast %cst_50 : f32 to vector<5x2x8xf32>
      %c0_51 = arith.constant 0 : index
      %c0_52 = arith.constant 0 : index
      %c0_53 = arith.constant 0 : index
      %84 = vector.load %arg6[%c0_51, %c0_52, %c0_53] : memref<5x2x8xf32, #tpu.memory_space<vmem>>, vector<5x2x8xf32>
      tpu.vector_store %arg6[%c0_51, %c0_52, %c0_53], %83 {strides = array<i32>} : memref<5x2x8xf32, #tpu.memory_space<vmem>>, vector<5x2x8xf32>,
    } else {
    }
    %c0 = arith.constant 0 : index
    %c0_1 = arith.constant 0 : index
    %c0_2 = arith.constant 0 : index
    %3 = vector.load %arg3[%c0, %c0_1, %c0_2] : memref<2x8x16xf32, #tpu.memory_space<vmem>>, vector<2x8x16xf32>
    %4 = arith.mulf %3, %3 : vector<2x8x16xf32>
    %cst = arith.constant -5.000000e+01 : f32
    %5 = vector.broadcast %cst : f32 to vector<2x8x16xf32>
    %6 = arith.mulf %5, %4 : vector<2x8x16xf32>
    %cst_3 = arith.constant -9.000000e+01 : f32
    %7 = vector.broadcast %cst_3 : f32 to vector<2x8x16xf32>
    %8 = arith.mulf %7, %3 : vector<2x8x16xf32>
    %9 = arith.addf %6, %8 : vector<2x8x16xf32>
    %cst_4 = arith.constant -4.050000e+01 : f32
    %10 = vector.broadcast %cst_4 : f32 to vector<2x8x16xf32>
    %11 = arith.addf %9, %10 : vector<2x8x16xf32>
    %c0_5 = arith.constant 0 : index
    %c0_6 = arith.constant 0 : index
    %c0_7 = arith.constant 0 : index
    %12 = vector.load %arg6[%c0_5, %c0_6, %c0_7] : memref<5x2x8xf32, #tpu.memory_space<vmem>>, vector<1x2x8xf32>
    %13 = vector.shape_cast %12 : vector<1x2x8xf32> to vector<2x8xf32>
    %14 = math.exp %11 : vector<2x8x16xf32>
    %cst_8 = arith.constant dense<0.000000e+00> : vector<2x8xf32>
    %15 = vector.multi_reduction <add>, %14, %cst_8 [2] : vector<2x8x16xf32> to vector<2x8xf32>
    %16 = arith.addf %13, %15 : vector<2x8xf32>
    %c0_9 = arith.constant 0 : index
    %c0_10 = arith.constant 0 : index
    %c0_11 = arith.constant 0 : index
    %17 = vector.load %arg6[%c0_9, %c0_10, %c0_11] : memref<5x2x8xf32, #tpu.memory_space<vmem>>, vector<1x2x8xf32>
    %18 = vector.shape_cast %17 : vector<1x2x8xf32> to vector<2x8xf32>
    %19 = vector.shape_cast %16 : vector<2x8xf32> to vector<1x2x8xf32>
    tpu.vector_store %arg6[%c0_9, %c0_10, %c0_11], %19 {strides = array<i32>} : memref<5x2x8xf32, #tpu.memory_space<vmem>>, vector<1x2x8xf32>,
    %cst_12 = arith.constant -5.000000e+01 : f32
    %20 = vector.broadcast %cst_12 : f32 to vector<2x8x16xf32>
    %21 = arith.mulf %20, %4 : vector<2x8x16xf32>
    %cst_13 = arith.constant -5.000000e+01 : f32
    %22 = vector.broadcast %cst_13 : f32 to vector<2x8x16xf32>
    %23 = arith.mulf %22, %3 : vector<2x8x16xf32>
    %24 = arith.addf %21, %23 : vector<2x8x16xf32>
    %cst_14 = arith.constant -1.250000e+01 : f32
    %25 = vector.broadcast %cst_14 : f32 to vector<2x8x16xf32>
    %26 = arith.addf %24, %25 : vector<2x8x16xf32>
    %c1 = arith.constant 1 : index
    %c0_15 = arith.constant 0 : index
    %c0_16 = arith.constant 0 : index
    %27 = vector.load %arg6[%c1, %c0_15, %c0_16] : memref<5x2x8xf32, #tpu.memory_space<vmem>>, vector<1x2x8xf32>
    %28 = vector.shape_cast %27 : vector<1x2x8xf32> to vector<2x8xf32>
    %29 = math.exp %26 : vector<2x8x16xf32>
    %cst_17 = arith.constant dense<0.000000e+00> : vector<2x8xf32>
    %30 = vector.multi_reduction <add>, %29, %cst_17 [2] : vector<2x8x16xf32> to vector<2x8xf32>
    %31 = arith.addf %28, %30 : vector<2x8xf32>
    %c1_18 = arith.constant 1 : index
    %c0_19 = arith.constant 0 : index
    %c0_20 = arith.constant 0 : index
    %32 = vector.load %arg6[%c1_18, %c0_19, %c0_20] : memref<5x2x8xf32, #tpu.memory_space<vmem>>, vector<1x2x8xf32>
    %33 = vector.shape_cast %32 : vector<1x2x8xf32> to vector<2x8xf32>
    %34 = vector.shape_cast %31 : vector<2x8xf32> to vector<1x2x8xf32>
    tpu.vector_store %arg6[%c1_18, %c0_19, %c0_20], %34 {strides = array<i32>} : memref<5x2x8xf32, #tpu.memory_space<vmem>>, vector<1x2x8xf32>,
    %cst_21 = arith.constant -5.000000e+01 : f32
    %35 = vector.broadcast %cst_21 : f32 to vector<2x8x16xf32>
    %36 = arith.mulf %35, %4 : vector<2x8x16xf32>
    %cst_22 = arith.constant 0.000000e+00 : f32
    %37 = vector.broadcast %cst_22 : f32 to vector<2x8x16xf32>
    %38 = arith.mulf %37, %3 : vector<2x8x16xf32>
    %39 = arith.addf %36, %38 : vector<2x8x16xf32>
    %cst_23 = arith.constant -0.000000e+00 : f32
    %40 = vector.broadcast %cst_23 : f32 to vector<2x8x16xf32>
    %41 = arith.addf %39, %40 : vector<2x8x16xf32>
    %c2 = arith.constant 2 : index
    %c0_24 = arith.constant 0 : index
    %c0_25 = arith.constant 0 : index
    %42 = vector.load %arg6[%c2, %c0_24, %c0_25] : memref<5x2x8xf32, #tpu.memory_space<vmem>>, vector<1x2x8xf32>
    %43 = vector.shape_cast %42 : vector<1x2x8xf32> to vector<2x8xf32>
    %44 = math.exp %41 : vector<2x8x16xf32>
    %cst_26 = arith.constant dense<0.000000e+00> : vector<2x8xf32>
    %45 = vector.multi_reduction <add>, %44, %cst_26 [2] : vector<2x8x16xf32> to vector<2x8xf32>
    %46 = arith.addf %43, %45 : vector<2x8xf32>
    %c2_27 = arith.constant 2 : index
    %c0_28 = arith.constant 0 : index
    %c0_29 = arith.constant 0 : index
    %47 = vector.load %arg6[%c2_27, %c0_28, %c0_29] : memref<5x2x8xf32, #tpu.memory_space<vmem>>, vector<1x2x8xf32>
    %48 = vector.shape_cast %47 : vector<1x2x8xf32> to vector<2x8xf32>
    %49 = vector.shape_cast %46 : vector<2x8xf32> to vector<1x2x8xf32>
    tpu.vector_store %arg6[%c2_27, %c0_28, %c0_29], %49 {strides = array<i32>} : memref<5x2x8xf32, #tpu.memory_space<vmem>>, vector<1x2x8xf32>,
    %cst_30 = arith.constant -5.000000e+01 : f32
    %50 = vector.broadcast %cst_30 : f32 to vector<2x8x16xf32>
    %51 = arith.mulf %50, %4 : vector<2x8x16xf32>
    %cst_31 = arith.constant 5.000000e+01 : f32
    %52 = vector.broadcast %cst_31 : f32 to vector<2x8x16xf32>
    %53 = arith.mulf %52, %3 : vector<2x8x16xf32>
    %54 = arith.addf %51, %53 : vector<2x8x16xf32>
    %cst_32 = arith.constant -1.250000e+01 : f32
    %55 = vector.broadcast %cst_32 : f32 to vector<2x8x16xf32>
    %56 = arith.addf %54, %55 : vector<2x8x16xf32>
    %c3 = arith.constant 3 : index
    %c0_33 = arith.constant 0 : index
    %c0_34 = arith.constant 0 : index
    %57 = vector.load %arg6[%c3, %c0_33, %c0_34] : memref<5x2x8xf32, #tpu.memory_space<vmem>>, vector<1x2x8xf32>
    %58 = vector.shape_cast %57 : vector<1x2x8xf32> to vector<2x8xf32>
    %59 = math.exp %56 : vector<2x8x16xf32>
    %cst_35 = arith.constant dense<0.000000e+00> : vector<2x8xf32>
    %60 = vector.multi_reduction <add>, %59, %cst_35 [2] : vector<2x8x16xf32> to vector<2x8xf32>
    %61 = arith.addf %58, %60 : vector<2x8xf32>
    %c3_36 = arith.constant 3 : index
    %c0_37 = arith.constant 0 : index
    %c0_38 = arith.constant 0 : index
    %62 = vector.load %arg6[%c3_36, %c0_37, %c0_38] : memref<5x2x8xf32, #tpu.memory_space<vmem>>, vector<1x2x8xf32>
    %63 = vector.shape_cast %62 : vector<1x2x8xf32> to vector<2x8xf32>
    %64 = vector.shape_cast %61 : vector<2x8xf32> to vector<1x2x8xf32>
    tpu.vector_store %arg6[%c3_36, %c0_37, %c0_38], %64 {strides = array<i32>} : memref<5x2x8xf32, #tpu.memory_space<vmem>>, vector<1x2x8xf32>,
    %cst_39 = arith.constant -5.000000e+01 : f32
    %65 = vector.broadcast %cst_39 : f32 to vector<2x8x16xf32>
    %66 = arith.mulf %65, %4 : vector<2x8x16xf32>
    %cst_40 = arith.constant 9.000000e+01 : f32
    %67 = vector.broadcast %cst_40 : f32 to vector<2x8x16xf32>
    %68 = arith.mulf %67, %3 : vector<2x8x16xf32>
    %69 = arith.addf %66, %68 : vector<2x8x16xf32>
    %cst_41 = arith.constant -4.050000e+01 : f32
    %70 = vector.broadcast %cst_41 : f32 to vector<2x8x16xf32>
    %71 = arith.addf %69, %70 : vector<2x8x16xf32>
    %c4 = arith.constant 4 : index
    %c0_42 = arith.constant 0 : index
    %c0_43 = arith.constant 0 : index
    %72 = vector.load %arg6[%c4, %c0_42, %c0_43] : memref<5x2x8xf32, #tpu.memory_space<vmem>>, vector<1x2x8xf32>
    %73 = vector.shape_cast %72 : vector<1x2x8xf32> to vector<2x8xf32>
    %74 = math.exp %71 : vector<2x8x16xf32>
    %cst_44 = arith.constant dense<0.000000e+00> : vector<2x8xf32>
    %75 = vector.multi_reduction <add>, %74, %cst_44 [2] : vector<2x8x16xf32> to vector<2x8xf32>
    %76 = arith.addf %73, %75 : vector<2x8xf32>
    %c4_45 = arith.constant 4 : index
    %c0_46 = arith.constant 0 : index
    %c0_47 = arith.constant 0 : index
    %77 = vector.load %arg6[%c4_45, %c0_46, %c0_47] : memref<5x2x8xf32, #tpu.memory_space<vmem>>, vector<1x2x8xf32>
    %78 = vector.shape_cast %77 : vector<1x2x8xf32> to vector<2x8xf32>
    %79 = vector.shape_cast %76 : vector<2x8xf32> to vector<1x2x8xf32>
    tpu.vector_store %arg6[%c4_45, %c0_46, %c0_47], %79 {strides = array<i32>} : memref<5x2x8xf32, #tpu.memory_space<vmem>>, vector<1x2x8xf32>,
    %c0_i32_48 = arith.constant 0 : i32
    %80 = arith.cmpi eq, %arg2, %c0_i32_48 : i32
    %81 = arith.extui %80 : i1 to i32
    %c0_i32_49 = arith.constant 0 : i32
    %82 = arith.cmpi ne, %81, %c0_i32_49 : i32
    scf.if %82 {
      %c0_50 = arith.constant 0 : index
      %c0_51 = arith.constant 0 : index
      %83 = vector.load %arg4[%c0_50, %c0_51] : memref<2x8xi32, #tpu.memory_space<vmem>>, vector<2x8xi32>
      %c0_i32_52 = arith.constant 0 : i32
      %84 = vector.broadcast %c0_i32_52 : i32 to vector<2x8xi32>
      %85 = arith.cmpi sgt, %83, %84 : vector<2x8xi32>
      %c0_53 = arith.constant 0 : index
      %c0_54 = arith.constant 0 : index
      %c0_55 = arith.constant 0 : index
      %86 = vector.load %arg6[%c0_53, %c0_54, %c0_55] : memref<5x2x8xf32, #tpu.memory_space<vmem>>, vector<1x2x8xf32>
      %87 = vector.shape_cast %86 : vector<1x2x8xf32> to vector<2x8xf32>
      %cst_56 = arith.constant 0.000000e+00 : f32
      %88 = vector.broadcast %cst_56 : f32 to vector<2x8xf32>
      %89 = arith.select %85, %88, %87 : vector<2x8xi1>, vector<2x8xf32>
      %cst_57 = arith.constant 1.000000e-10 : f32
      %90 = vector.broadcast %cst_57 : f32 to vector<2x8xf32>
      %91 = arith.addf %89, %90 : vector<2x8xf32>
      %92 = math.log %91 : vector<2x8xf32>
      %cst_58 = arith.constant dense<0.000000e+00> : vector<2xf32>
      %93 = vector.multi_reduction <add>, %92, %cst_58 [1] : vector<2x8xf32> to vector<2xf32>
      %94 = vector.shape_cast %93 : vector<2xf32> to vector<2x1xf32>
      %c1_59 = arith.constant 1 : index
      %c0_60 = arith.constant 0 : index
      %c0_61 = arith.constant 0 : index
      %95 = vector.load %arg6[%c1_59, %c0_60, %c0_61] : memref<5x2x8xf32, #tpu.memory_space<vmem>>, vector<1x2x8xf32>
      %96 = vector.shape_cast %95 : vector<1x2x8xf32> to vector<2x8xf32>
      %cst_62 = arith.constant 0.000000e+00 : f32
      %97 = vector.broadcast %cst_62 : f32 to vector<2x8xf32>
      %98 = arith.select %85, %97, %96 : vector<2x8xi1>, vector<2x8xf32>
      %cst_63 = arith.constant 1.000000e-10 : f32
      %99 = vector.broadcast %cst_63 : f32 to vector<2x8xf32>
      %100 = arith.addf %98, %99 : vector<2x8xf32>
      %101 = math.log %100 : vector<2x8xf32>
      %cst_64 = arith.constant dense<0.000000e+00> : vector<2xf32>
      %102 = vector.multi_reduction <add>, %101, %cst_64 [1] : vector<2x8xf32> to vector<2xf32>
      %103 = vector.shape_cast %102 : vector<2xf32> to vector<2x1xf32>
      %c2_65 = arith.constant 2 : index
      %c0_66 = arith.constant 0 : index
      %c0_67 = arith.constant 0 : index
      %104 = vector.load %arg6[%c2_65, %c0_66, %c0_67] : memref<5x2x8xf32, #tpu.memory_space<vmem>>, vector<1x2x8xf32>
      %105 = vector.shape_cast %104 : vector<1x2x8xf32> to vector<2x8xf32>
      %cst_68 = arith.constant 0.000000e+00 : f32
      %106 = vector.broadcast %cst_68 : f32 to vector<2x8xf32>
      %107 = arith.select %85, %106, %105 : vector<2x8xi1>, vector<2x8xf32>
      %cst_69 = arith.constant 1.000000e-10 : f32
      %108 = vector.broadcast %cst_69 : f32 to vector<2x8xf32>
      %109 = arith.addf %107, %108 : vector<2x8xf32>
      %110 = math.log %109 : vector<2x8xf32>
      %cst_70 = arith.constant dense<0.000000e+00> : vector<2xf32>
      %111 = vector.multi_reduction <add>, %110, %cst_70 [1] : vector<2x8xf32> to vector<2xf32>
      %112 = vector.shape_cast %111 : vector<2xf32> to vector<2x1xf32>
      %c3_71 = arith.constant 3 : index
      %c0_72 = arith.constant 0 : index
      %c0_73 = arith.constant 0 : index
      %113 = vector.load %arg6[%c3_71, %c0_72, %c0_73] : memref<5x2x8xf32, #tpu.memory_space<vmem>>, vector<1x2x8xf32>
      %114 = vector.shape_cast %113 : vector<1x2x8xf32> to vector<2x8xf32>
      %cst_74 = arith.constant 0.000000e+00 : f32
      %115 = vector.broadcast %cst_74 : f32 to vector<2x8xf32>
      %116 = arith.select %85, %115, %114 : vector<2x8xi1>, vector<2x8xf32>
      %cst_75 = arith.constant 1.000000e-10 : f32
      %117 = vector.broadcast %cst_75 : f32 to vector<2x8xf32>
      %118 = arith.addf %116, %117 : vector<2x8xf32>
      %119 = math.log %118 : vector<2x8xf32>
      %cst_76 = arith.constant dense<0.000000e+00> : vector<2xf32>
      %120 = vector.multi_reduction <add>, %119, %cst_76 [1] : vector<2x8xf32> to vector<2xf32>
      %121 = vector.shape_cast %120 : vector<2xf32> to vector<2x1xf32>
      %c4_77 = arith.constant 4 : index
      %c0_78 = arith.constant 0 : index
      %c0_79 = arith.constant 0 : index
      %122 = vector.load %arg6[%c4_77, %c0_78, %c0_79] : memref<5x2x8xf32, #tpu.memory_space<vmem>>, vector<1x2x8xf32>
      %123 = vector.shape_cast %122 : vector<1x2x8xf32> to vector<2x8xf32>
      %cst_80 = arith.constant 0.000000e+00 : f32
      %124 = vector.broadcast %cst_80 : f32 to vector<2x8xf32>
      %125 = arith.select %85, %124, %123 : vector<2x8xi1>, vector<2x8xf32>
      %cst_81 = arith.constant 1.000000e-10 : f32
      %126 = vector.broadcast %cst_81 : f32 to vector<2x8xf32>
      %127 = arith.addf %125, %126 : vector<2x8xf32>
      %128 = math.log %127 : vector<2x8xf32>
      %cst_82 = arith.constant dense<0.000000e+00> : vector<2xf32>
      %129 = vector.multi_reduction <add>, %128, %cst_82 [1] : vector<2x8xf32> to vector<2xf32>
      %130 = vector.shape_cast %129 : vector<2xf32> to vector<2x1xf32>
      %131 = tpu.concatenate %94, %103, %112, %121, %130 in 1 : vector<2x1xf32>, vector<2x1xf32>, vector<2x1xf32>, vector<2x1xf32>, vector<2x1xf32> -> vector<2x5xf32>
      %c0_i32_83 = arith.constant 0 : i32
      %132 = arith.cmpi eq, %arg1, %c0_i32_83 : i32
      %133 = arith.extui %132 : i1 to i32
      %c0_i32_84 = arith.constant 0 : i32
      %134 = arith.cmpi ne, %133, %c0_i32_84 : i32
      scf.if %134 {
        %c0_87 = arith.constant 0 : index
        %c0_88 = arith.constant 0 : index
        %138 = vector.load %arg5[%c0_87, %c0_88] : memref<2x5xf32, #tpu.memory_space<vmem>>, vector<2x5xf32>
        tpu.vector_store %arg5[%c0_87, %c0_88], %131 {strides = array<i32>} : memref<2x5xf32, #tpu.memory_space<vmem>>, vector<2x5xf32>,
      } else {
      }
      %c0_i32_85 = arith.constant 0 : i32
      %135 = arith.cmpi sgt, %arg1, %c0_i32_85 : i32
      %136 = arith.extui %135 : i1 to i32
      %c0_i32_86 = arith.constant 0 : i32
      %137 = arith.cmpi ne, %136, %c0_i32_86 : i32
      scf.if %137 {
        %c0_87 = arith.constant 0 : index
        %c0_88 = arith.constant 0 : index
        %138 = vector.load %arg5[%c0_87, %c0_88] : memref<2x5xf32, #tpu.memory_space<vmem>>, vector<2x5xf32>
        %139 = arith.addf %138, %131 : vector<2x5xf32>
        %c0_89 = arith.constant 0 : index
        %c0_90 = arith.constant 0 : index
        %140 = vector.load %arg5[%c0_89, %c0_90] : memref<2x5xf32, #tpu.memory_space<vmem>>, vector<2x5xf32>
        tpu.vector_store %arg5[%c0_89, %c0_90], %139 {strides = array<i32>} : memref<2x5xf32, #tpu.memory_space<vmem>>, vector<2x5xf32>,
      } else {
      }
    } else {
    }
    return
  }
  func.func @transform_0(%arg0: i32, %arg1: i32, %arg2: i32) -> (i32, i32, i32) {
    %c0_i32 = arith.constant 0 : i32
    return %arg0, %arg1, %arg2 : i32, i32, i32
  }
  func.func @transform_1(%arg0: i32, %arg1: i32, %arg2: i32) -> (i32, i32) {
    %c0_i32 = arith.constant 0 : i32
    return %arg0, %arg1 : i32, i32
  }
  func.func @transform_2(%arg0: i32, %arg1: i32, %arg2: i32) -> (i32, i32) {
    %c0_i32 = arith.constant 0 : i32
    %c0_i32_0 = arith.constant 0 : i32
    return %arg0, %c0_i32 : i32, i32
  }
}

</mosaic_0001>

<llo_original>
// kernel: tpu_custom_call.1
$region0: #{tpu_custom_call.1}
  #allocation0 [shape = 'u32[]', space=smem, size = 0x4, offset = 0x4, fixed_abs, tag = 'smem constant byte address 0x4 - core index']
  #allocation1 [shape = 'u32[72,128]{1,0:T(1,128)}', space=vmem, size = 0x9000, scoped, tag = 'internal scratch']
  #allocation2 [shape = 'f32[5,2,8]{2,1,0:T(2,128)}', space=vmem, size = 0x1400, scoped, tag = 'scratch operand']
  %s0 = inlined_call_operand.hbm [shape: f32[2,8,16], index: 0, kind: input, shape index: {}]
  %s1 = inlined_call_operand.hbm [shape: s32[2,8], index: 1, kind: input, shape index: {}]
  %s2 = inlined_call_operand.hbm [shape: f32[2,5], index: 2, kind: output, shape index: {}]
  %s3 = sld [smem:[#allocation0]]
  $region42: #{tpu_custom_call.1} parent=0
    _
  %s5 = ssub.s32 1, %s3
  %s6 = scalar_select 0, %s5, %s3
  $region1: #{tpu_custom_call.1} parent=0
    #allocation3 [shape = 'u8[8192]{0}', space=vmem, size = 0x2000, scoped, tag = 'input window, operand 0, single buffered']
    #allocation4 [shape = 's32[1]{0}', space=sflag, size = 0x4, scoped, tag = 'scoped memory for tpu_custom_call.1']
    #allocation5 [shape = 's32[1]{0}', space=sflag, size = 0x4, scoped, tag = 'scoped memory for tpu_custom_call.1']
    #allocation6 [shape = 'u8[1024]{0}', space=vmem, size = 0x400, scoped, tag = 'input window, operand 1, single buffered']
    #allocation7 [shape = 's32[1]{0}', space=sflag, size = 0x4, scoped, tag = 'scoped memory for tpu_custom_call.1']
    #allocation8 [shape = 'u8[1024]{0}', space=vmem, size = 0x400, scoped, tag = 'output window, operand 0, single buffered']
    %7 = vsyncpa [#allocation4], 0
    %8 = vsyncpa [#allocation7], 0
    %9 = vsyncpa [#allocation5], 0
    // Predicated region
    $region2: #{tpu_custom_call.1} parent=1 // pred_check
      _
    $region3: #{tpu_custom_call.1} parent=1 // pred_check_branch
      %11 = sbr.rel (0) target = $region5
    $region4: #{tpu_custom_call.1} parent=1 // pred_region
      %13 = vsyncadd [#allocation4], 0
      %s14 = sshll.u32 %s0, 4
      %s15 = int_to_ptr.hbm [resolvable:$true] %s14
      %s16 = sshll.u32 [#allocation3], 4
      %s17 = int_to_ptr.vmem [resolvable:$true] %s16
      %22 = dma.hbm_to_vmem [thread:$0]  %s15, 256, %s17, [#allocation4], 128, 128, 8
    $region5: #{tpu_custom_call.1} parent=1 // pred_fallthru
      _
    // Predicated region
    $region6: #{tpu_custom_call.1} parent=1 // pred_check
      _
    $region7: #{tpu_custom_call.1} parent=1 // pred_check_branch
      %24 = sbr.rel (0) target = $region9
    $region8: #{tpu_custom_call.1} parent=1 // pred_region
      %26 = vsyncadd [#allocation7], 0
      %s28 = sshll.u32 %s1, 4
      %s29 = int_to_ptr.hbm [resolvable:$true] %s28
      %s30 = sshll.u32 [#allocation6], 4
      %s31 = int_to_ptr.vmem [resolvable:$true] %s30
      %33 = dma.hbm_to_vmem [thread:$0]  %s29, 32, %s31, [#allocation7]
    $region9: #{tpu_custom_call.1} parent=1 // pred_fallthru
      _
    // Predicated region
    $region10: #{tpu_custom_call.1} parent=1 // pred_check
      _
    $region11: #{tpu_custom_call.1} parent=1 // pred_check_branch
      %35 = sbr.rel (0) target = $region13
    $region12: #{tpu_custom_call.1} parent=1 // pred_region
      %37 = dma.done [#allocation4], 256
    $region13: #{tpu_custom_call.1} parent=1 // pred_fallthru
      _
    // Predicated region
    $region14: #{tpu_custom_call.1} parent=1 // pred_check
      _
    $region15: #{tpu_custom_call.1} parent=1 // pred_check_branch
      %39 = sbr.rel (0) target = $region17
    $region16: #{tpu_custom_call.1} parent=1 // pred_region
      %41 = dma.done [#allocation7], 32
    $region17: #{tpu_custom_call.1} parent=1 // pred_fallthru
      _
    %p42 = scmp.eq.s32.totalorder 0, 0
    // Predicated region
    $region18: #{tpu_custom_call.1} parent=1 // pred_check
      %p43 = pneg %p42
    $region19: #{tpu_custom_call.1} parent=1 // pred_check_branch
      %45 = sbr.rel (%p43) target = $region21
    $region20: #{tpu_custom_call.1} parent=1 // pred_region
      %vm46 = vcmask 58368
      %47 = vst.msk [vmem:[#allocation2] sm:$0x3] %vm46, 0.0
      %48 = vst.msk [vmem:[#allocation2 + $0x2] sm:$0x3] %vm46, 0.0
      %49 = vst.msk [vmem:[#allocation2 + $0x4] sm:$0x3] %vm46, 0.0
      %50 = vst.msk [vmem:[#allocation2 + $0x6] sm:$0x3] %vm46, 0.0
      %51 = vst.msk [vmem:[#allocation2 + $0x8] sm:$0x3] %vm46, 0.0
    $region21: #{tpu_custom_call.1} parent=1 // pred_fallthru
      _
    %v52 = vld [vmem:[#allocation3] sm:$0xff]
    %v53 = vld [vmem:[#allocation3 + $0x8] sm:$0xff]
    %v54 = vmul.f32 %v52, %v52
    %v55 = vmul.f32 %v53, %v53
    %v56 = vmul.f32 %v54, -50.0
    %v57 = vmul.f32 %v55, -50.0
    %v58 = vmul.f32 %v52, -90.0
    %v59 = vmul.f32 %v53, -90.0
    %v60 = vadd.f32 %v56, %v58
    %v61 = vadd.f32 %v57, %v59
    %v62 = vadd.f32 %v60, -40.5
    %v63 = vadd.f32 %v61, -40.5
    %v64 = vld [vmem:[#allocation2] sm:$0x3]
    %v65 = vmul.f32 %v62, 1.442695
    %v66 = vpow.pop %v65
    %v67 = vmul.f32 %v63, 1.442695
    %v68 = vpow.pop %v67
    %vm69 = vcmask 130048
    %v70 = vsel %vm69, %v66, 0.0
    %71 = vadd.xlane.f32.xlu0 %v70
    %v72 = vpop.xlane.xlu0 %71
    %v73 = vsel %vm69, %v68, 0.0
    %74 = vadd.xlane.f32.xlu0 %v73
    %v75 = vpop.xlane.xlu0 %74
    %v78 = vlaneseq
    %v79 = vand.u32 %v78, 127
    %v80 = vperm.slane %v72, %v79
    %v81 = vperm.slane %v75, %v79
    %vm82 = vcmask 1041409
    %v83 = vsel %vm82, %v81, %v80
    %v85 = vadd.f32 %v64, %v83
    %vm86 = vcmask 58368
    %87 = vst.msk [vmem:[#allocation2] sm:$0x3] %vm86, %v85
    %v88 = vmul.f32 %v52, -50.0
    %v89 = vmul.f32 %v53, -50.0
    %v90 = vadd.f32 %v56, %v88
    %v91 = vadd.f32 %v57, %v89
    %v92 = vadd.f32 %v90, -12.5
    %v93 = vadd.f32 %v91, -12.5
    %s94 = scalar_lea.vmem [#allocation2], 2
    %v95 = vld [vmem:[%s94] sm:$0x3]
    %v96 = vmul.f32 %v92, 1.442695
    %v97 = vpow.pop %v96
    %v98 = vmul.f32 %v93, 1.442695
    %v99 = vpow.pop %v98
    %v100 = vsel %vm69, %v97, 0.0
    %101 = vadd.xlane.f32.xlu0 %v100
    %v102 = vpop.xlane.xlu0 %101
    %v103 = vsel %vm69, %v99, 0.0
    %104 = vadd.xlane.f32.xlu0 %v103
    %v105 = vpop.xlane.xlu0 %104
    %v108 = vperm.slane %v102, %v79
    %v109 = vperm.slane %v105, %v79
    %v110 = vsel %vm82, %v109, %v108
    %v112 = vadd.f32 %v95, %v110
    %113 = vst.msk [vmem:[%s94] sm:$0x3] %vm86, %v112
    %v114 = vmul.f32 %v52, 0.0
    %v115 = vmul.f32 %v53, 0.0
    %v116 = vadd.f32 %v56, %v114
    %v117 = vadd.f32 %v57, %v115
    %s118 = scalar_lea.vmem [#allocation2], 4
    %v119 = vld [vmem:[%s118] sm:$0x3]
    %v120 = vmul.f32 %v116, 1.442695
    %v121 = vpow.pop %v120
    %v122 = vmul.f32 %v117, 1.442695
    %v123 = vpow.pop %v122
    %v124 = vsel %vm69, %v121, 0.0
    %125 = vadd.xlane.f32.xlu0 %v124
    %v126 = vpop.xlane.xlu0 %125
    %v127 = vsel %vm69, %v123, 0.0
    %128 = vadd.xlane.f32.xlu0 %v127
    %v129 = vpop.xlane.xlu0 %128
    %v132 = vperm.slane %v126, %v79
    %v133 = vperm.slane %v129, %v79
    %v134 = vsel %vm82, %v133, %v132
    %v136 = vadd.f32 %v119, %v134
    %137 = vst.msk [vmem:[%s118] sm:$0x3] %vm86, %v136
    %v138 = vmul.f32 %v52, 50.0
    %v139 = vmul.f32 %v53, 50.0
    %v140 = vadd.f32 %v56, %v138
    %v141 = vadd.f32 %v57, %v139
    %v142 = vadd.f32 %v140, -12.5
    %v143 = vadd.f32 %v141, -12.5
    %s144 = scalar_lea.vmem [#allocation2], 6
    %v145 = vld [vmem:[%s144] sm:$0x3]
    %v146 = vmul.f32 %v142, 1.442695
    %v147 = vpow.pop %v146
    %v148 = vmul.f32 %v143, 1.442695
    %v149 = vpow.pop %v148
    %v150 = vsel %vm69, %v147, 0.0
    %151 = vadd.xlane.f32.xlu0 %v150
    %v152 = vpop.xlane.xlu0 %151
    %v153 = vsel %vm69, %v149, 0.0
    %154 = vadd.xlane.f32.xlu0 %v153
    %v155 = vpop.xlane.xlu0 %154
    %v158 = vperm.slane %v152, %v79
    %v159 = vperm.slane %v155, %v79
    %v160 = vsel %vm82, %v159, %v158
    %v162 = vadd.f32 %v145, %v160
    %163 = vst.msk [vmem:[%s144] sm:$0x3] %vm86, %v162
    %v164 = vmul.f32 %v52, 90.0
    %v165 = vmul.f32 %v53, 90.0
    %v166 = vadd.f32 %v56, %v164
    %v167 = vadd.f32 %v57, %v165
    %v168 = vadd.f32 %v166, -40.5
    %v169 = vadd.f32 %v167, -40.5
    %s170 = scalar_lea.vmem [#allocation2], 8
    %v171 = vld [vmem:[%s170] sm:$0x3]
    %v172 = vmul.f32 %v168, 1.442695
    %v173 = vpow.pop %v172
    %v174 = vmul.f32 %v169, 1.442695
    %v175 = vpow.pop %v174
    %v176 = vsel %vm69, %v173, 0.0
    %177 = vadd.xlane.f32.xlu0 %v176
    %v178 = vpop.xlane.xlu0 %177
    %v179 = vsel %vm69, %v175, 0.0
    %180 = vadd.xlane.f32.xlu0 %v179
    %v181 = vpop.xlane.xlu0 %180
    %v184 = vperm.slane %v178, %v79
    %v185 = vperm.slane %v181, %v79
    %v186 = vsel %vm82, %v185, %v184
    %v188 = vadd.f32 %v171, %v186
    %189 = vst.msk [vmem:[%s170] sm:$0x3] %vm86, %v188
    // Predicated region
    $region22: #{tpu_custom_call.1} parent=1 // pred_check
      %p190 = pneg %p42
    $region23: #{tpu_custom_call.1} parent=1 // pred_check_branch
      %192 = sbr.rel (%p190) target = $region25
    $region24: #{tpu_custom_call.1} parent=1 // pred_region
      %v193 = vld [vmem:[#allocation6] sm:$0x3]
      %vm194 = vcmp.gt.s32.totalorder %v193, 0
      %v195 = vld [vmem:[#allocation2] sm:$0x3]
      %v196 = vsel %vm194, 0.0, %v195
      %v197 = vadd.f32 %v196, 1e-10
      %v198 = vlog2.pop %v197
      %v199 = vmul.f32 %v198, 0.6931472
      %v200 = vsel %vm86, %v199, 0.0
      %201 = vadd.xlane.f32.xlu0 %v200
      %v202 = vpop.xlane.xlu0 %201
      %v203 = vld [vmem:[%s94] sm:$0x3]
      %v204 = vsel %vm194, 0.0, %v203
      %v205 = vadd.f32 %v204, 1e-10
      %v206 = vlog2.pop %v205
      %v207 = vmul.f32 %v206, 0.6931472
      %v208 = vsel %vm86, %v207, 0.0
      %209 = vadd.xlane.f32.xlu0 %v208
      %v210 = vpop.xlane.xlu0 %209
      %v211 = vld [vmem:[%s118] sm:$0x3]
      %v212 = vsel %vm194, 0.0, %v211
      %v213 = vadd.f32 %v212, 1e-10
      %v214 = vlog2.pop %v213
      %v215 = vmul.f32 %v214, 0.6931472
      %v216 = vsel %vm86, %v215, 0.0
      %217 = vadd.xlane.f32.xlu0 %v216
      %v218 = vpop.xlane.xlu0 %217
      %v219 = vld [vmem:[%s144] sm:$0x3]
      %v220 = vsel %vm194, 0.0, %v219
      %v221 = vadd.f32 %v220, 1e-10
      %v222 = vlog2.pop %v221
      %v223 = vmul.f32 %v222, 0.6931472
      %v224 = vsel %vm86, %v223, 0.0
      %225 = vadd.xlane.f32.xlu0 %v224
      %v226 = vpop.xlane.xlu0 %225
      %v227 = vld [vmem:[%s170] sm:$0x3]
      %v228 = vsel %vm194, 0.0, %v227
      %v229 = vadd.f32 %v228, 1e-10
      %v230 = vlog2.pop %v229
      %v231 = vmul.f32 %v230, 0.6931472
      %v232 = vsel %vm86, %v231, 0.0
      %233 = vadd.xlane.f32.xlu0 %v232
      %v234 = vpop.xlane.xlu0 %233
      %vm235 = vcmask 7168
      %v236 = vsel %vm235, %v202, %v210
      %vm237 = vcmask 15360
      %v238 = vsel %vm237, %v236, %v218
      %vm239 = vcmask 23552
      %v240 = vsel %vm239, %v238, %v226
      %vm241 = vcmask 31744
      %v242 = vsel %vm241, %v240, %v234
      %p243 = scmp.eq.s32.totalorder 0, 0
      // Predicated region
      $region26: #{tpu_custom_call.1} parent=24 // pred_check
        %p244 = pneg %p243
      $region27: #{tpu_custom_call.1} parent=24 // pred_check_branch
        %246 = sbr.rel (%p244) target = $region29
      $region28: #{tpu_custom_call.1} parent=24 // pred_region
        %vm247 = vcmask 33792
        %248 = vst.msk [vmem:[#allocation8] sm:$0x3] %vm247, %v242
      $region29: #{tpu_custom_call.1} parent=24 // pred_fallthru
        _
      %p249 = scmp.gt.s32.totalorder 0, 0
      // Predicated region
      $region30: #{tpu_custom_call.1} parent=24 // pred_check
        %p250 = pneg %p249
      $region31: #{tpu_custom_call.1} parent=24 // pred_check_branch
        %252 = sbr.rel (%p250) target = $region33
      $region32: #{tpu_custom_call.1} parent=24 // pred_region
        %v253 = vld [vmem:[#allocation8] sm:$0x3]
        %v254 = vadd.f32 %v253, %v242
        %vm255 = vcmask 33792
        %256 = vst.msk [vmem:[#allocation8] sm:$0x3] %vm255, %v254
      $region33: #{tpu_custom_call.1} parent=24 // pred_fallthru
        _
    $region25: #{tpu_custom_call.1} parent=1 // pred_fallthru
      _
    // Predicated region
    $region34: #{tpu_custom_call.1} parent=1 // pred_check
      _
    $region35: #{tpu_custom_call.1} parent=1 // pred_check_branch
      %258 = sbr.rel (0) target = $region37
    $region36: #{tpu_custom_call.1} parent=1 // pred_region
      %260 = vsyncadd [#allocation5], 0
      %s262 = sshll.u32 [#allocation8], 4
      %s263 = int_to_ptr.vmem [resolvable:$true] %s262
      %s264 = sshll.u32 %s2, 4
      %s265 = int_to_ptr.hbm [resolvable:$true] %s264
      %267 = dma.vmem_to_hbm [thread:$0]  %s263, 32, %s265, [#allocation5]
    $region37: #{tpu_custom_call.1} parent=1 // pred_fallthru
      _
    // Predicated region
    $region38: #{tpu_custom_call.1} parent=1 // pred_check
      _
    $region39: #{tpu_custom_call.1} parent=1 // pred_check_branch
      %269 = sbr.rel (0) target = $region41
    $region40: #{tpu_custom_call.1} parent=1 // pred_region
      %271 = dma.done [#allocation5], 32
    $region41: #{tpu_custom_call.1} parent=1 // pred_fallthru
      _
    %272 = vsyncpa [#allocation4], 1
    %273 = vsyncpa [#allocation7], 1
    %274 = vsyncpa [#allocation5], 1

</llo_original>
